<compile_context>
chip_gen: v7x
topology: tpu7x:2x2x1
jax: 0.10.0
libtpu: 0.0.40
codegen_flags: <defaults>
</compile_context>

<pallas_src>
import functools
import math

import jax
import jax.numpy as jnp
from jax.experimental import pallas as pl
from jax.experimental.pallas import tpu as pltpu


def _time_embedding_kernel(t_ref, w_ref, b_ref, out_ref, emb_ref, *,
                           half, h_dim, max_period, fuse_first_matmul):
    # t_ref:   (N, 1)            f32   timesteps
    # w_ref:   (2*half + H, H)   bf16  [w1 cos rows | w1 sin rows | w2] slab
    # b_ref:   (2, H)            f32   [b1 ; b2]
    # out_ref: (N, H)            f32
    # emb_ref: (N, 2*half)       bf16  VMEM scratch (fused path only)
    t = t_ref[...]                                                 # (N, 1)

    # Frequency table generated in-kernel (iota + EUP exp): no freqs DMA.
    col = jax.lax.broadcasted_iota(jnp.int32, (1, half), 1).astype(jnp.float32)
    freqs = jnp.exp(col * jnp.float32(-math.log(max_period) / half))
    args = t * freqs                                               # (N, half) f32

    if fuse_first_matmul:
        # v6e/v7x: one K=2*half pass on the 256-deep MXU (no partial-sum add).
        emb_ref[:, :half] = jnp.cos(args).astype(emb_ref.dtype)
        emb_ref[:, half:] = jnp.sin(args).astype(emb_ref.dtype)
        h = jnp.dot(emb_ref[...], w_ref[:2 * half, :],
                    preferred_element_type=jnp.float32)
    else:
        # v5e: two native K=128 passes, no concat slab.
        cos_part = jnp.cos(args).astype(w_ref.dtype)
        sin_part = jnp.sin(args).astype(w_ref.dtype)
        h = jnp.dot(cos_part, w_ref[:half, :],
                    preferred_element_type=jnp.float32)
        h = h + jnp.dot(sin_part, w_ref[half:2 * half, :],
                        preferred_element_type=jnp.float32)

    h = h + b_ref[0:1, :]                                          # (N, H) f32
    # SiLU: divide on the EUP reciprocal slot instead of the VALU.
    h = h * pl.reciprocal(1.0 + jnp.exp(-h), approx=True)

    o = jnp.dot(h.astype(w_ref.dtype), w_ref[2 * half:, :],
                preferred_element_type=jnp.float32)
    out_ref[...] = o + b_ref[1:2, :]


def prepare_time_embedding_params(w1, b1, w2, b2, *,
                                  frequency_embedding_size=256):
    """One-time (init) preprocessing: cast to bf16 and pack into two slabs.

    w1: (F, H), w2: (H, H) are nn.Linear weights stored pre-transposed as
    (in_features, out_features); b1, b2: (H,).

    Returns:
      w_slab: (2*(F//2) + H, H) bf16 -- [w1 cos rows | w1 sin rows | w2].
              For odd F the zero-pad embedding column multiplies w1's last
              row, so dropping that row preserves exact semantics.
      b_slab: (2, H) f32 -- [b1 ; b2].
    """
    half = frequency_embedding_size // 2
    h_dim = w1.shape[1]
    assert w2.shape == (h_dim, h_dim)
    w_slab = jnp.concatenate(
        [w1[:2 * half].astype(jnp.bfloat16), w2.astype(jnp.bfloat16)], axis=0)
    b_slab = jnp.stack([b1, b2], axis=0).astype(jnp.float32)
    return w_slab, b_slab


@functools.partial(jax.jit,
                   static_argnames=("frequency_embedding_size", "max_period",
                                    "fuse_first_matmul"))
def time_embedding(t, w_slab, b_slab, *, frequency_embedding_size=256,
                   max_period=10000, fuse_first_matmul=None):
    """t: (N,) float array of timesteps; slabs from prepare_time_embedding_params."""
    if t.ndim == 0:
        t = t[None]
    n = t.shape[0]
    half = frequency_embedding_size // 2
    h_dim = w_slab.shape[1]

    # Alignment guards (avoid silent perf cliffs: sublane repack copies,
    # masked vst partial stores).
    assert half % 16 == 0, "F//2 must be a multiple of the bf16 sublane tile (16)"
    assert h_dim % 128 == 0, "hidden_size must be lane-dense (multiple of 128)"
    if fuse_first_matmul is None:
        # Fused K=2*half matmul needs a lane-aligned scratch write at `half`.
        fuse_first_matmul = (half % 128 == 0)

    t2d = t.astype(jnp.float32).reshape(n, 1)

    kernel = functools.partial(_time_embedding_kernel, half=half, h_dim=h_dim,
                               max_period=max_period,
                               fuse_first_matmul=fuse_first_matmul)

    flops = 2 * n * (2 * half * h_dim + h_dim * h_dim)
    transcendentals = n * (2 * half + 2 * h_dim) + half   # cos, sin, exp, rcp, freqs
    bytes_accessed = (2 * w_slab.size                     # bf16 weight slab
                      + 4 * (t2d.size + b_slab.size + n * h_dim))

    vmem_spec = pl.BlockSpec(memory_space=pltpu.MemorySpace.VMEM)
    return pl.pallas_call(
        kernel,
        out_shape=jax.ShapeDtypeStruct((n, h_dim), jnp.float32),
        in_specs=[vmem_spec] * 3,
        out_specs=vmem_spec,
        scratch_shapes=[pltpu.VMEM((n, 2 * half), jnp.bfloat16)],
        compiler_params=pltpu.CompilerParams(
            vmem_limit_bytes=2 * 1024 * 1024),
        cost_estimate=pl.CostEstimate(flops=flops,
                                      transcendentals=transcendentals,
                                      bytes_accessed=bytes_accessed),
    )(t2d, w_slab, b_slab)


def _reference(t, w1, b1, w2, b2, frequency_embedding_size=256,
               max_period=10000, bf16_matmuls=False):
    """Pure-JAX reference.  bf16_matmuls=True mirrors the kernel's precision."""
    if t.ndim == 0:
        t = t[None]
    half = frequency_embedding_size // 2
    freqs = jnp.exp(jnp.arange(half, dtype=jnp.float32)
                    * jnp.float32(-math.log(max_period) / half))
    args = t.astype(jnp.float32)[:, None] * freqs[None]
    emb = jnp.concatenate([jnp.cos(args), jnp.sin(args)], axis=-1)
    if frequency_embedding_size % 2:
        emb = jnp.concatenate([emb, jnp.zeros_like(emb[:, :1])], axis=-1)
    if bf16_matmuls:
        h = jnp.dot(emb.astype(jnp.bfloat16), w1.astype(jnp.bfloat16),
                    preferred_element_type=jnp.float32) + b1
        h = h * jax.nn.sigmoid(h)
        return jnp.dot(h.astype(jnp.bfloat16), w2.astype(jnp.bfloat16),
                       preferred_element_type=jnp.float32) + b2
    h = emb @ w1 + b1
    h = h * jax.nn.sigmoid(h)
    return h @ w2 + b2


if __name__ == "__main__":
    hidden_size = 128
    frequency_embedding_size = 256
    n = 8  # batch of timesteps

    key = jax.random.PRNGKey(0)
    k_t, k_w1, k_b1, k_w2, k_b2 = jax.random.split(key, 5)

    # Deterministic synthetic parameters (PyTorch nn.Linear stores (out, in);
    # we keep them pre-transposed as (in, out) for the kernel).
    w1 = jax.random.normal(k_w1, (frequency_embedding_size, hidden_size),
                           jnp.float32) * 0.02
    b1 = jax.random.normal(k_b1, (hidden_size,), jnp.float32) * 0.02
    w2 = jax.random.normal(k_w2, (hidden_size, hidden_size),
                           jnp.float32) * 0.02
    b2 = jax.random.normal(k_b2, (hidden_size,), jnp.float32) * 0.02

    # Fractional timesteps, like diffusion schedules may produce.
    t = jax.random.uniform(k_t, (n,), jnp.float32, 0.0, 1000.0)

    # One-time parameter packing (hoisted out of the per-step call).
    w_slab, b_slab = prepare_time_embedding_params(
        w1, b1, w2, b2, frequency_embedding_size=frequency_embedding_size)
    w_slab, b_slab = jax.block_until_ready((w_slab, b_slab))

    out = time_embedding(t, w_slab, b_slab,
                         frequency_embedding_size=frequency_embedding_size)
    out = jax.block_until_ready(out)
    assert out.shape == (n, hidden_size)

    # Check vs. a reference mirroring the kernel's bf16 matmul operands
    # (residual error: approx EUP reciprocal in the SiLU, accumulation order).
    ref_bf16 = _reference(t, w1, b1, w2, b2, frequency_embedding_size,
                          bf16_matmuls=True)
    assert jnp.allclose(out, ref_bf16, atol=2e-3, rtol=2e-3)

    # Looser semantics check vs. the pure-f32 (PyTorch-equivalent) reference;
    # drift comes only from bf16 weight narrowing on the MXU.
    ref_f32 = _reference(t, w1, b1, w2, b2, frequency_embedding_size)
    assert jnp.allclose(out, ref_f32, atol=1e-2, rtol=1e-1)

    print("KERNEL_OK")
</pallas_src>

<mosaic_0001>
module attributes {stable_mosaic.version = 11 : i64} {
  func.func @_time_embedding_kernel(%arg0: memref<8x1xf32, #tpu.memory_space<vmem>>, %arg1: memref<384x128xbf16, #tpu.memory_space<vmem>>, %arg2: memref<2x128xf32, #tpu.memory_space<vmem>>, %arg3: memref<8x128xf32, #tpu.memory_space<vmem>>, %arg4: memref<8x256xbf16, #tpu.memory_space<vmem>>) attributes {dimension_semantics = [], scalar_prefetch = 0 : i64, scratch_operands = 1 : i64, tpu.core_type = #tpu.core_type<tc>} {
    %c0 = arith.constant 0 : index
    %c0_0 = arith.constant 0 : index
    %0 = vector.load %arg0[%c0, %c0_0] : memref<8x1xf32, #tpu.memory_space<vmem>>, vector<8x1xf32>
    %1 = tpu.iota {dimensions = array<i32: 1>} : vector<1x128xi32>
    %2 = arith.sitofp %1 : vector<1x128xi32> to vector<1x128xf32>
    %cst = arith.constant -0.0719557852 : f32
    %3 = vector.broadcast %cst : f32 to vector<1x128xf32>
    %4 = arith.mulf %2, %3 : vector<1x128xf32>
    %5 = math.exp %4 : vector<1x128xf32>
    %6 = vector.broadcast %0 : vector<8x1xf32> to vector<8x128xf32>
    %7 = vector.broadcast %5 : vector<1x128xf32> to vector<8x128xf32>
    %8 = arith.mulf %6, %7 : vector<8x128xf32>
    %9 = math.cos %8 : vector<8x128xf32>
    %10 = arith.truncf %9 : vector<8x128xf32> to vector<8x128xbf16>
    %c0_1 = arith.constant 0 : index
    %c0_2 = arith.constant 0 : index
    %11 = vector.load %arg4[%c0_1, %c0_2] : memref<8x256xbf16, #tpu.memory_space<vmem>>, vector<8x128xbf16>
    tpu.vector_store %arg4[%c0_1, %c0_2], %10 {strides = array<i32>} : memref<8x256xbf16, #tpu.memory_space<vmem>>, vector<8x128xbf16>,
    %12 = math.sin %8 : vector<8x128xf32>
    %13 = arith.truncf %12 : vector<8x128xf32> to vector<8x128xbf16>
    %c0_3 = arith.constant 0 : index
    %c128 = arith.constant 128 : index
    %14 = vector.load %arg4[%c0_3, %c128] : memref<8x256xbf16, #tpu.memory_space<vmem>>, vector<8x128xbf16>
    tpu.vector_store %arg4[%c0_3, %c128], %13 {strides = array<i32>} : memref<8x256xbf16, #tpu.memory_space<vmem>>, vector<8x128xbf16>,
    %c0_4 = arith.constant 0 : index
    %c0_5 = arith.constant 0 : index
    %15 = vector.load %arg4[%c0_4, %c0_5] : memref<8x256xbf16, #tpu.memory_space<vmem>>, vector<8x256xbf16>
    %c0_6 = arith.constant 0 : index
    %c0_7 = arith.constant 0 : index
    %16 = vector.load %arg1[%c0_6, %c0_7] : memref<384x128xbf16, #tpu.memory_space<vmem>>, vector<256x128xbf16>
    %cst_8 = arith.constant dense<0.000000e+00> : vector<8x128xf32>
    %17 = tpu.matmul %15, %16, %cst_8 {dimension_numbers = #tpu.dot_dimension_numbers<[1], [0], [0], [1], [0, 0, 1, 1], [], []>} : vector<8x256xbf16>, vector<256x128xbf16>, vector<8x128xf32> -> vector<8x128xf32>
    %c0_9 = arith.constant 0 : index
    %c0_10 = arith.constant 0 : index
    %18 = vector.load %arg2[%c0_9, %c0_10] : memref<2x128xf32, #tpu.memory_space<vmem>>, vector<1x128xf32>
    %19 = vector.broadcast %18 : vector<1x128xf32> to vector<8x128xf32>
    %20 = arith.addf %17, %19 : vector<8x128xf32>
    %cst_11 = arith.constant 0.000000e+00 : f32
    %21 = vector.broadcast %cst_11 : f32 to vector<8x128xf32>
    %22 = arith.subf %21, %20 : vector<8x128xf32>
    %23 = math.exp %22 : vector<8x128xf32>
    %cst_12 = arith.constant 1.000000e+00 : f32
    %24 = vector.broadcast %cst_12 : f32 to vector<8x128xf32>
    %25 = arith.addf %24, %23 : vector<8x128xf32>
    %26 = tpu.reciprocal %25 {approx = true} : vector<8x128xf32> -> vector<8x128xf32>
    %27 = arith.mulf %20, %26 : vector<8x128xf32>
    %28 = arith.truncf %27 : vector<8x128xf32> to vector<8x128xbf16>
    %c256 = arith.constant 256 : index
    %c0_13 = arith.constant 0 : index
    %29 = vector.load %arg1[%c256, %c0_13] : memref<384x128xbf16, #tpu.memory_space<vmem>>, vector<128x128xbf16>
    %cst_14 = arith.constant dense<0.000000e+00> : vector<8x128xf32>
    %30 = tpu.matmul %28, %29, %cst_14 {dimension_numbers = #tpu.dot_dimension_numbers<[1], [0], [0], [1], [0, 0, 1, 1], [], []>} : vector<8x128xbf16>, vector<128x128xbf16>, vector<8x128xf32> -> vector<8x128xf32>
    %c1 = arith.constant 1 : index
    %c0_15 = arith.constant 0 : index
    %31 = vector.load %arg2[%c1, %c0_15] : memref<2x128xf32, #tpu.memory_space<vmem>>, vector<1x128xf32>
    %32 = vector.broadcast %31 : vector<1x128xf32> to vector<8x128xf32>
    %33 = arith.addf %30, %32 : vector<8x128xf32>
    %c0_16 = arith.constant 0 : index
    %c0_17 = arith.constant 0 : index
    %34 = vector.load %arg3[%c0_16, %c0_17] : memref<8x128xf32, #tpu.memory_space<vmem>>, vector<8x128xf32>
    tpu.vector_store %arg3[%c0_16, %c0_17], %33 {strides = array<i32>} : memref<8x128xf32, #tpu.memory_space<vmem>>, vector<8x128xf32>,
    return
  }
}

</mosaic_0001>

<llo_original>
// kernel: time_embedding.1
$region0: #{time_embedding.1}
  #allocation0 [shape = 'u32[]', space=smem, size = 0x4, offset = 0x4, fixed_abs, tag = 'smem constant byte address 0x4 - core index']
  #allocation1 [shape = 'u32[144,128]{1,0:T(1,128)}', space=vmem, size = 0x12000, scoped, tag = 'internal scratch']
  #allocation2 [shape = 'bf16[8,256]{1,0:T(8,128)(2,1)}', space=vmem, size = 0x1000, scoped, tag = 'scratch operand']
  %s0 = inlined_call_operand.vmem [shape: f32[8,1], index: 0, kind: input, shape index: {}]
  %s1 = inlined_call_operand.hbm [shape: bf16[384,128], index: 1, kind: input, shape index: {}]
  %s2 = inlined_call_operand.vmem [shape: f32[2,128], index: 2, kind: input, shape index: {}]
  %s3 = inlined_call_operand.hbm [shape: f32[8,128], index: 3, kind: output, shape index: {}]
  %s4 = sld [smem:[#allocation0]]
  $region26: #{time_embedding.1} parent=0
    _
  %s6 = ssub.s32 1, %s4
  %s7 = scalar_select 0, %s6, %s4
  $region1: #{time_embedding.1} parent=0
    #allocation3 [shape = 'u8[98304]{0}', space=vmem, size = 0x18000, scoped, tag = 'input window, operand 1, single buffered']
    #allocation4 [shape = 's32[1]{0}', space=sflag, size = 0x4, scoped, tag = 'scoped memory for time_embedding.1']
    #allocation5 [shape = 's32[1]{0}', space=sflag, size = 0x4, scoped, tag = 'scoped memory for time_embedding.1']
    #allocation6 [shape = 'u8[4096]{0}', space=vmem, size = 0x1000, scoped, tag = 'output window, operand 0, single buffered']
    %8 = vsyncpa [#allocation4], 0
    %9 = vsyncpa [#allocation5], 0
    // Predicated region
    $region2: #{time_embedding.1} parent=1 // pred_check
      _
    $region3: #{time_embedding.1} parent=1 // pred_check_branch
      %11 = sbr.rel (0) target = $region5
    $region4: #{time_embedding.1} parent=1 // pred_region
      _
    $region5: #{time_embedding.1} parent=1 // pred_fallthru
      _
    // Predicated region
    $region6: #{time_embedding.1} parent=1 // pred_check
      _
    $region7: #{time_embedding.1} parent=1 // pred_check_branch
      %13 = sbr.rel (0) target = $region9
    $region8: #{time_embedding.1} parent=1 // pred_region
      %s15 = ssub.s32 3072, 3072
      %16 = vsyncadd [#allocation4], %s15
      %s17 = sshll.u32 [#allocation3], 4
      %s18 = int_to_ptr.vmem [resolvable:$true] %s17
      %23 = dma.hbm_to_vmem [thread:$0]  %s1, 3072, %s18, [#allocation4], 64, 64, 4
    $region9: #{time_embedding.1} parent=1 // pred_fallthru
      _
    // Predicated region
    $region10: #{time_embedding.1} parent=1 // pred_check
      _
    $region11: #{time_embedding.1} parent=1 // pred_check_branch
      %25 = sbr.rel (0) target = $region13
    $region12: #{time_embedding.1} parent=1 // pred_region
      _
    $region13: #{time_embedding.1} parent=1 // pred_fallthru
      _
    // Predicated region
    $region14: #{time_embedding.1} parent=1 // pred_check
      _
    $region15: #{time_embedding.1} parent=1 // pred_check_branch
      %27 = sbr.rel (0) target = $region17
    $region16: #{time_embedding.1} parent=1 // pred_region
      %28 = dma.done [#allocation4], 3072
    $region17: #{time_embedding.1} parent=1 // pred_fallthru
      _
    %v30 = vld [vmem:[%s0] sm:$0xff]
    %v31 = vlaneseq
    %v32 = vand.u32 %v31, 127
    %v33 = vcvt.s32.f32 %v32
    %v34 = vmul.f32 %v33, -0.071955785
    %v35 = vmul.f32 %v34, 1.442695
    %v36 = vpow.pop %v35
    %38 = vset.pattern.permute.xlu0 0
    %39 = vperm.xlu0 %38, %v30
    %v40 = vpop.permute.xlu0 %39
    %v42 = vmul.f32 %v40, %v36
    %v43 = vand.u32 2147483647, %v42
    %vm44 = vcmp.le.f32.partialorder %v43, 0.7853982
    %vm45 = vcmp.lt.s32.totalorder %v42, 0
    %v46 = vand.u32 %v42, 2139095040
    %v47 = vshrl.u32 %v46, 23
    %v48 = vsub.s32 %v47, 127
    %v49 = vand.u32 2147483647, %v42
    %v50 = vand.u32 %v49, 8388607
    %v51 = vor.u32 %v50, 8388608
    %v52 = vsub.s32 0, %v51
    %v53 = vadd.s32 %v48, 1
    %vm54 = vcmp.gt.s32.totalorder %v53, 0
    %v55 = vsel %vm54, %v53, 0
    %v56 = vshrl.u32 %v55, 5
    %v57 = vand.u32 %v55, 31
    %v58 = vsub.s32 32, %v57
    %v59 = vshrl.u32 683565275, %v58
    %v60 = vshll.u32 683565275, %v57
    %v61 = vshrl.u32 2475754826, %v58
    %v62 = vor.u32 %v60, %v61
    %v63 = vshll.u32 2475754826, %v57
    %v64 = vshrl.u32 2131351028, %v58
    %v65 = vor.u32 %v63, %v64
    %v66 = vshll.u32 2131351028, %v57
    %v67 = vshrl.u32 2102212464, %v58
    %v68 = vor.u32 %v66, %v67
    %v69 = vshll.u32 2102212464, %v57
    %v70 = vshrl.u32 920167782, %v58
    %v71 = vor.u32 %v69, %v70
    %v72 = vshll.u32 920167782, %v57
    %v73 = vshrl.u32 1326507024, %v58
    %v74 = vor.u32 %v72, %v73
    %vm75 = vcmp.lt.s32.totalorder %v56, 1
    %vm76 = vcmp.lt.s32.totalorder %v56, 2
    %vm77 = vcmp.lt.s32.totalorder %v56, 3
    %vm78 = vcmp.lt.s32.totalorder %v56, 4
    %v79 = vsel %vm75, %v59, %v62
    %v80 = vsel %vm78, %v68, 2102212464
    %v81 = vsel %vm77, %v65, %v80
    %v82 = vsel %vm76, %v79, %v81
    %v83 = vsel %vm75, %v62, %v65
    %v84 = vsel %vm78, %v71, 920167782
    %v85 = vsel %vm77, %v68, %v84
    %v86 = vsel %vm76, %v83, %v85
    %v87 = vsel %vm75, %v65, %v68
    %v88 = vsel %vm78, %v74, 1326507024
    %v89 = vsel %vm77, %v71, %v88
    %v90 = vsel %vm76, %v87, %v89
    %v91 = vshll.u32 %v51, 8
    %v92 = vmul.u32.u64.compose %v91, %v90
    %v93 = vextract.low.u32 %v92
    %v94 = vextract.high.u32 %v92
    %v95 = vmul.u32.u64.compose %v91, %v86
    %v96 = vextract.low.u32 %v95
    %v97 = vextract.high.u32 %v95
    %v98 = vmul.u32 %v91, %v82
    %v99 = vadd.s32 %v94, %v96
    %vm100 = vc.u32 %v94, %v96
    %v101 = vadd.s32 %v97, 1
    %v102 = vsel %vm100, %v101, %v97
    %v103 = vadd.s32 %v98, %v102
    %v104 = vadd.s32 %v103, 536870912
    %v105 = vshrl.u32 %v104, 30
    %v106 = vshll.u32 %v105, 30
    %v107 = vsub.s32 %v103, %v106
    %vm108 = vcmp.lt.s32.totalorder %v107, 0
    %v109 = vsub.s32 0, %v107
    %v110 = vsel %vm108, %v109, %v107
    %v111 = vclz %v110
    %v112 = vsub.s32 %v111, 2
    %vm113 = vcmp.gt.s32.totalorder 0, %v112
    %v114 = vsel %vm113, 0, %v112
    %v115 = vsub.s32 32, %v114
    %v116 = vshll.u32 %v107, %v114
    %v117 = vshrl.u32 %v99, %v115
    %v118 = vor.u32 %v116, %v117
    %v119 = vsub.s32 4294967266, %v114
    %v120 = vadd.s32 %v119, 127
    %v121 = vshll.u32 %v120, 23
    %v122 = vor.u32 4788187, %v121
    %v123 = vand.u32 2147483647, %v122
    %v125 = vcvt.s32.f32 %v118
    %v126 = vmul.f32 %v125, %v123
    %v127 = vxor.u32 %v126, 2147483648
    %v128 = vsel %vm45, %v127, %v126
    %v129 = vsub.s32 4, %v105
    %v130 = vsel %vm45, %v129, %v105
    %v131 = vsel %vm44, %v42, %v128
    %v132 = vsel %vm44, 0, %v130
    %v133 = vcosq.f32.pop %v131
    %v134 = vsinq.f32.pop %v131
    %vm135 = vweird.f32 %v42
    %v136 = vand.u32 %v132, 3
    %vm137 = vcmp.lt.s32.totalorder %v136, 2
    %vm138 = vcmp.eq.s32.totalorder %v136, 0
    %v139 = vxor.u32 %v134, 2147483648
    %v140 = vsel %vm138, %v133, %v139
    %vm141 = vcmp.eq.s32.totalorder %v136, 2
    %v142 = vxor.u32 %v133, 2147483648
    %v143 = vsel %vm141, %v142, %v134
    %v144 = vsel %vm137, %v140, %v143
    %v145 = vsel %vm135, nan, %v144
    %v146 = vpack.c.bf16 %v145, %v145
    %147 = vst [vmem:[#allocation2] sm:$0xf] %v146
    %v148 = vand.u32 2147483647, %v42
    %vm149 = vcmp.le.f32.partialorder %v148, 0.7853982
    %vm150 = vcmp.lt.s32.totalorder %v42, 0
    %v151 = vand.u32 %v42, 2139095040
    %v152 = vshrl.u32 %v151, 23
    %v153 = vsub.s32 %v152, 127
    %v154 = vand.u32 2147483647, %v42
    %v155 = vand.u32 %v154, 8388607
    %v156 = vor.u32 %v155, 8388608
    %v157 = vsub.s32 0, %v156
    %v158 = vadd.s32 %v153, 1
    %vm159 = vcmp.gt.s32.totalorder %v158, 0
    %v160 = vsel %vm159, %v158, 0
    %v161 = vshrl.u32 %v160, 5
    %v162 = vand.u32 %v160, 31
    %v163 = vsub.s32 32, %v162
    %v164 = vshrl.u32 683565275, %v163
    %v165 = vshll.u32 683565275, %v162
    %v166 = vshrl.u32 2475754826, %v163
    %v167 = vor.u32 %v165, %v166
    %v168 = vshll.u32 2475754826, %v162
    %v169 = vshrl.u32 2131351028, %v163
    %v170 = vor.u32 %v168, %v169
    %v171 = vshll.u32 2131351028, %v162
    %v172 = vshrl.u32 2102212464, %v163
    %v173 = vor.u32 %v171, %v172
    %v174 = vshll.u32 2102212464, %v162
    %v175 = vshrl.u32 920167782, %v163
    %v176 = vor.u32 %v174, %v175
    %v177 = vshll.u32 920167782, %v162
    %v178 = vshrl.u32 1326507024, %v163
    %v179 = vor.u32 %v177, %v178
    %vm180 = vcmp.lt.s32.totalorder %v161, 1
    %vm181 = vcmp.lt.s32.totalorder %v161, 2
    %vm182 = vcmp.lt.s32.totalorder %v161, 3
    %vm183 = vcmp.lt.s32.totalorder %v161, 4
    %v184 = vsel %vm180, %v164, %v167
    %v185 = vsel %vm183, %v173, 2102212464
    %v186 = vsel %vm182, %v170, %v185
    %v187 = vsel %vm181, %v184, %v186
    %v188 = vsel %vm180, %v167, %v170
    %v189 = vsel %vm183, %v176, 920167782
    %v190 = vsel %vm182, %v173, %v189
    %v191 = vsel %vm181, %v188, %v190
    %v192 = vsel %vm180, %v170, %v173
    %v193 = vsel %vm183, %v179, 1326507024
    %v194 = vsel %vm182, %v176, %v193
    %v195 = vsel %vm181, %v192, %v194
    %v196 = vshll.u32 %v156, 8
    %v197 = vmul.u32.u64.compose %v196, %v195
    %v198 = vextract.low.u32 %v197
    %v199 = vextract.high.u32 %v197
    %v200 = vmul.u32.u64.compose %v196, %v191
    %v201 = vextract.low.u32 %v200
    %v202 = vextract.high.u32 %v200
    %v203 = vmul.u32 %v196, %v187
    %v204 = vadd.s32 %v199, %v201
    %vm205 = vc.u32 %v199, %v201
    %v206 = vadd.s32 %v202, 1
    %v207 = vsel %vm205, %v206, %v202
    %v208 = vadd.s32 %v203, %v207
    %v209 = vadd.s32 %v208, 536870912
    %v210 = vshrl.u32 %v209, 30
    %v211 = vshll.u32 %v210, 30
    %v212 = vsub.s32 %v208, %v211
    %vm213 = vcmp.lt.s32.totalorder %v212, 0
    %v214 = vsub.s32 0, %v212
    %v215 = vsel %vm213, %v214, %v212
    %v216 = vclz %v215
    %v217 = vsub.s32 %v216, 2
    %vm218 = vcmp.gt.s32.totalorder 0, %v217
    %v219 = vsel %vm218, 0, %v217
    %v220 = vsub.s32 32, %v219
    %v221 = vshll.u32 %v212, %v219
    %v222 = vshrl.u32 %v204, %v220
    %v223 = vor.u32 %v221, %v222
    %v224 = vsub.s32 4294967266, %v219
    %v225 = vadd.s32 %v224, 127
    %v226 = vshll.u32 %v225, 23
    %v227 = vor.u32 4788187, %v226
    %v228 = vand.u32 2147483647, %v227
    %v230 = vcvt.s32.f32 %v223
    %v231 = vmul.f32 %v230, %v228
    %v232 = vxor.u32 %v231, 2147483648
    %v233 = vsel %vm150, %v232, %v231
    %v234 = vsub.s32 4, %v210
    %v235 = vsel %vm150, %v234, %v210
    %v236 = vsel %vm149, %v42, %v233
    %v237 = vsel %vm149, 0, %v235
    %v238 = vcosq.f32.pop %v236
    %v239 = vsinq.f32.pop %v236
    %vm240 = vweird.f32 %v42
    %v241 = vadd.s32 %v237, 3
    %v242 = vand.u32 %v241, 3
    %vm243 = vcmp.lt.s32.totalorder %v242, 2
    %vm244 = vcmp.eq.s32.totalorder %v242, 0
    %v245 = vxor.u32 %v239, 2147483648
    %v246 = vsel %vm244, %v238, %v245
    %vm247 = vcmp.eq.s32.totalorder %v242, 2
    %v248 = vxor.u32 %v238, 2147483648
    %v249 = vsel %vm247, %v248, %v239
    %v250 = vsel %vm243, %v246, %v249
    %v251 = vsel %vm240, nan, %v250
    %v252 = vpack.c.bf16 %v251, %v251
    %253 = vst [vmem:[#allocation2 + $0x4] sm:$0xf] %v252
    %v254 = vld [vmem:[#allocation2] sm:$0xff]
    %v255 = vld [vmem:[#allocation3] sm:$0xf]
    %v256 = vld [vmem:[#allocation3 + $0x4] sm:$0xf]
    %v257 = vld [vmem:[#allocation3 + $0x8] sm:$0xf]
    %v258 = vld [vmem:[#allocation3 + $0xc] sm:$0xf]
    %v259 = vld [vmem:[#allocation3 + $0x10] sm:$0xf]
    %v260 = vld [vmem:[#allocation3 + $0x14] sm:$0xf]
    %v261 = vld [vmem:[#allocation3 + $0x18] sm:$0xf]
    %v262 = vld [vmem:[#allocation3 + $0x1c] sm:$0xf]
    %v263 = vld [vmem:[#allocation3 + $0x20] sm:$0xf]
    %v264 = vld [vmem:[#allocation3 + $0x24] sm:$0xf]
    %v265 = vld [vmem:[#allocation3 + $0x28] sm:$0xf]
    %v266 = vld [vmem:[#allocation3 + $0x2c] sm:$0xf]
    %v267 = vld [vmem:[#allocation3 + $0x30] sm:$0xf]
    %v268 = vld [vmem:[#allocation3 + $0x34] sm:$0xf]
    %v269 = vld [vmem:[#allocation3 + $0x38] sm:$0xf]
    %v270 = vld [vmem:[#allocation3 + $0x3c] sm:$0xf]
    %v271 = vld [vmem:[#allocation3 + $0x40] sm:$0xf]
    %v272 = vld [vmem:[#allocation3 + $0x44] sm:$0xf]
    %v273 = vld [vmem:[#allocation3 + $0x48] sm:$0xf]
    %v274 = vld [vmem:[#allocation3 + $0x4c] sm:$0xf]
    %v275 = vld [vmem:[#allocation3 + $0x50] sm:$0xf]
    %v276 = vld [vmem:[#allocation3 + $0x54] sm:$0xf]
    %v277 = vld [vmem:[#allocation3 + $0x58] sm:$0xf]
    %v278 = vld [vmem:[#allocation3 + $0x5c] sm:$0xf]
    %v279 = vld [vmem:[#allocation3 + $0x60] sm:$0xf]
    %v280 = vld [vmem:[#allocation3 + $0x64] sm:$0xf]
    %v281 = vld [vmem:[#allocation3 + $0x68] sm:$0xf]
    %v282 = vld [vmem:[#allocation3 + $0x6c] sm:$0xf]
    %v283 = vld [vmem:[#allocation3 + $0x70] sm:$0xf]
    %v284 = vld [vmem:[#allocation3 + $0x74] sm:$0xf]
    %v285 = vld [vmem:[#allocation3 + $0x78] sm:$0xf]
    %v286 = vld [vmem:[#allocation3 + $0x7c] sm:$0xf]
    %v287 = vld [vmem:[%s2] sm:$0x1]
    %v288 = vlaneseq
    %v289 = vshrl.u32 %v288, 7
    %v290 = vsub.s32 0, %v289
    %v291 = vrot.slane %v287, %v290
    %v293 = vunpack.c.l.b16 %v254
    %v294 = vunpack.c.h.b16 %v254
    %v295 = vpack.c.b16 %v293, %v293
    %v296 = vpack.c.b16 %v294, %v294
    %v331 = vunpack.c.l.b16 %v255
    %v332 = vunpack.c.l.b16 %v256
    %v333 = vunpack.c.l.b16 %v257
    %v334 = vunpack.c.l.b16 %v258
    %v335 = vunpack.c.l.b16 %v259
    %v336 = vunpack.c.l.b16 %v260
    %v337 = vunpack.c.l.b16 %v261
    %v338 = vunpack.c.l.b16 %v262
    %v339 = vunpack.c.l.b16 %v263
    %v340 = vunpack.c.l.b16 %v264
    %v341 = vunpack.c.l.b16 %v265
    %v342 = vunpack.c.l.b16 %v266
    %v343 = vunpack.c.l.b16 %v267
    %v344 = vunpack.c.l.b16 %v268
    %v345 = vunpack.c.l.b16 %v269
    %v346 = vunpack.c.l.b16 %v270
    %v347 = vunpack.c.l.b16 %v271
    %v348 = vunpack.c.l.b16 %v272
    %v349 = vunpack.c.l.b16 %v273
    %v350 = vunpack.c.l.b16 %v274
    %v351 = vunpack.c.l.b16 %v275
    %v352 = vunpack.c.l.b16 %v276
    %v353 = vunpack.c.l.b16 %v277
    %v354 = vunpack.c.l.b16 %v278
    %v355 = vunpack.c.l.b16 %v279
    %v356 = vunpack.c.l.b16 %v280
    %v357 = vunpack.c.l.b16 %v281
    %v358 = vunpack.c.l.b16 %v282
    %v359 = vunpack.c.l.b16 %v283
    %v360 = vunpack.c.l.b16 %v284
    %v361 = vunpack.c.l.b16 %v285
    %v362 = vunpack.c.l.b16 %v286
    %v363 = vpack.c.b16 %v332, %v331
    %v364 = vpack.c.b16 %v334, %v333
    %v365 = vpack.c.b16 %v336, %v335
    %v366 = vpack.c.b16 %v338, %v337
    %v367 = vpack.c.b16 %v340, %v339
    %v368 = vpack.c.b16 %v342, %v341
    %v369 = vpack.c.b16 %v344, %v343
    %v370 = vpack.c.b16 %v346, %v345
    %v371 = vpack.c.b16 %v348, %v347
    %v372 = vpack.c.b16 %v350, %v349
    %v373 = vpack.c.b16 %v352, %v351
    %v374 = vpack.c.b16 %v354, %v353
    %v375 = vpack.c.b16 %v356, %v355
    %v376 = vpack.c.b16 %v358, %v357
    %v377 = vpack.c.b16 %v360, %v359
    %v378 = vpack.c.b16 %v362, %v361
    %395 = vmatprep.subr.bf16.mxu0 0
    %396 = vmatpush1.bf16.msra.mxu0 %v363
    %397 = vmatprep.subr.bf16.mxu0 0
    %398 = vmatpush1.bf16.msra.mxu0 %v364
    %399 = vmatprep.subr.bf16.mxu0 0
    %400 = vmatpush1.bf16.msra.mxu0 %v365
    %401 = vmatprep.subr.bf16.mxu0 0
    %402 = vmatpush1.bf16.msra.mxu0 %v366
    %403 = vmatprep.subr.bf16.mxu0 0
    %404 = vmatpush1.bf16.msra.mxu0 %v367
    %405 = vmatprep.subr.bf16.mxu0 0
    %406 = vmatpush1.bf16.msra.mxu0 %v368
    %407 = vmatprep.subr.bf16.mxu0 0
    %408 = vmatpush1.bf16.msra.mxu0 %v369
    %409 = vmatprep.subr.bf16.mxu0 0
    %410 = vmatpush1.bf16.msra.mxu0 %v370
    %411 = vmatprep.subr.bf16.mxu0 0
    %412 = vmatpush1.bf16.msra.mxu0 %v371
    %413 = vmatprep.subr.bf16.mxu0 0
    %414 = vmatpush1.bf16.msra.mxu0 %v372
    %415 = vmatprep.subr.bf16.mxu0 0
    %416 = vmatpush1.bf16.msra.mxu0 %v373
    %417 = vmatprep.subr.bf16.mxu0 0
    %418 = vmatpush1.bf16.msra.mxu0 %v374
    %419 = vmatprep.subr.bf16.mxu0 0
    %420 = vmatpush1.bf16.msra.mxu0 %v375
    %421 = vmatprep.subr.bf16.mxu0 0
    %422 = vmatpush1.bf16.msra.mxu0 %v376
    %423 = vmatprep.subr.bf16.mxu0 0
    %424 = vmatpush1.bf16.msra.mxu0 %v377
    %425 = vmatprep.subr.bf16.mxu0 0
    %426 = vmatpush1.bf16.msra.mxu0 %v378
    %427 = vmatprep.mubr.bf16.mxu0 %v296
    %428 = vmatmul.mubr.bf16.gmra.mrb[0].mxu0 %v295
    %v429 = vpop.f32.mrb[0].mxu0
    %v430 = vadd.f32 %v291, %v429
    %v431 = vpop.f32.mrb[0].mxu0
    %v432 = vpop.f32.mrb[0].mxu0
    %v433 = vpop.f32.mrb[0].mxu0
    %434 = vdwg.mxu0
    %v435 = vsub.f32 0.0, %v430
    %v436 = vmul.f32 %v435, 1.442695
    %v437 = vpow.pop %v436
    %v438 = vadd.f32 %v437, 1.0
    %v439 = vrcp.pop %v438
    %v440 = vmul.f32 %v430, %v439
    %v441 = vpack.c.bf16 %v440, %v440
    %v442 = vld [vmem:[#allocation3 + $0x80] sm:$0xf]
    %v443 = vld [vmem:[#allocation3 + $0x84] sm:$0xf]
    %v444 = vld [vmem:[#allocation3 + $0x88] sm:$0xf]
    %v445 = vld [vmem:[#allocation3 + $0x8c] sm:$0xf]
    %v446 = vld [vmem:[#allocation3 + $0x90] sm:$0xf]
    %v447 = vld [vmem:[#allocation3 + $0x94] sm:$0xf]
    %v448 = vld [vmem:[#allocation3 + $0x98] sm:$0xf]
    %v449 = vld [vmem:[#allocation3 + $0x9c] sm:$0xf]
    %v450 = vld [vmem:[#allocation3 + $0xa0] sm:$0xf]
    %v451 = vld [vmem:[#allocation3 + $0xa4] sm:$0xf]
    %v452 = vld [vmem:[#allocation3 + $0xa8] sm:$0xf]
    %v453 = vld [vmem:[#allocation3 + $0xac] sm:$0xf]
    %v454 = vld [vmem:[#allocation3 + $0xb0] sm:$0xf]
    %v455 = vld [vmem:[#allocation3 + $0xb4] sm:$0xf]
    %v456 = vld [vmem:[#allocation3 + $0xb8] sm:$0xf]
    %v457 = vld [vmem:[#allocation3 + $0xbc] sm:$0xf]
    %v458 = vld [vmem:[%s2 + $0x1] sm:$0x1]
    %v459 = vlaneseq
    %v460 = vshrl.u32 %v459, 7
    %v461 = vsub.s32 0, %v460
    %v462 = vrot.slane %v458, %v461
    %v479 = vunpack.c.l.b16 %v442
    %v480 = vunpack.c.l.b16 %v443
    %v481 = vunpack.c.l.b16 %v444
    %v482 = vunpack.c.l.b16 %v445
    %v483 = vunpack.c.l.b16 %v446
    %v484 = vunpack.c.l.b16 %v447
    %v485 = vunpack.c.l.b16 %v448
    %v486 = vunpack.c.l.b16 %v449
    %v487 = vunpack.c.l.b16 %v450
    %v488 = vunpack.c.l.b16 %v451
    %v489 = vunpack.c.l.b16 %v452
    %v490 = vunpack.c.l.b16 %v453
    %v491 = vunpack.c.l.b16 %v454
    %v492 = vunpack.c.l.b16 %v455
    %v493 = vunpack.c.l.b16 %v456
    %v494 = vunpack.c.l.b16 %v457
    %v495 = vpack.c.b16 %v480, %v479
    %v496 = vpack.c.b16 %v482, %v481
    %v497 = vpack.c.b16 %v484, %v483
    %v498 = vpack.c.b16 %v486, %v485
    %v499 = vpack.c.b16 %v488, %v487
    %v500 = vpack.c.b16 %v490, %v489
    %v501 = vpack.c.b16 %v492, %v491
    %v502 = vpack.c.b16 %v494, %v493
    %511 = vmatprep.subr.bf16.mxu0 0
    %512 = vmatpush1.bf16.msra.mxu0 %v495
    %513 = vmatprep.subr.bf16.mxu0 0
    %514 = vmatpush1.bf16.msra.mxu0 %v496
    %515 = vmatprep.subr.bf16.mxu0 0
    %516 = vmatpush1.bf16.msra.mxu0 %v497
    %517 = vmatprep.subr.bf16.mxu0 0
    %518 = vmatpush1.bf16.msra.mxu0 %v498
    %519 = vmatprep.subr.bf16.mxu0 0
    %520 = vmatpush1.bf16.msra.mxu0 %v499
    %521 = vmatprep.subr.bf16.mxu0 0
    %522 = vmatpush1.bf16.msra.mxu0 %v500
    %523 = vmatprep.subr.bf16.mxu0 0
    %524 = vmatpush1.bf16.msra.mxu0 %v501
    %525 = vmatprep.subr.bf16.mxu0 0
    %526 = vmatpush1.bf16.msra.mxu0 %v502
    %527 = vmatprep.subr.bf16.mxu0 0
    %528 = vmatpush1.bf16.msra.mxu0 0
    %529 = vmatprep.subr.bf16.mxu0 0
    %530 = vmatpush1.bf16.msra.mxu0 0
    %531 = vmatprep.subr.bf16.mxu0 0
    %532 = vmatpush1.bf16.msra.mxu0 0
    %533 = vmatprep.subr.bf16.mxu0 0
    %534 = vmatpush1.bf16.msra.mxu0 0
    %535 = vmatprep.subr.bf16.mxu0 0
    %536 = vmatpush1.bf16.msra.mxu0 0
    %537 = vmatprep.subr.bf16.mxu0 0
    %538 = vmatpush1.bf16.msra.mxu0 0
    %539 = vmatprep.subr.bf16.mxu0 0
    %540 = vmatpush1.bf16.msra.mxu0 0
    %541 = vmatprep.subr.bf16.mxu0 0
    %542 = vmatpush1.bf16.msra.mxu0 0
    %543 = vmatprep.mubr.bf16.mxu0 0
    %544 = vmatmul.mubr.bf16.gmra.mrb[0].mxu0 %v441
    %v545 = vpop.f32.mrb[0].mxu0
    %v546 = vadd.f32 %v462, %v545
    %v547 = vpop.f32.mrb[0].mxu0
    %v548 = vpop.f32.mrb[0].mxu0
    %v549 = vpop.f32.mrb[0].mxu0
    %550 = vdwg.mxu0
    %551 = vst [vmem:[#allocation6] sm:$0xff] %v546
    // Predicated region
    $region18: #{time_embedding.1} parent=1 // pred_check
      _
    $region19: #{time_embedding.1} parent=1 // pred_check_branch
      %553 = sbr.rel (0) target = $region21
    $region20: #{time_embedding.1} parent=1 // pred_region
      %s555 = ssub.s32 128, 128
      %556 = vsyncadd [#allocation5], %s555
      %s558 = sshll.u32 [#allocation6], 4
      %s559 = int_to_ptr.vmem [resolvable:$true] %s558
      %561 = dma.vmem_to_hbm [thread:$0]  %s559, 128, %s3, [#allocation5]
    $region21: #{time_embedding.1} parent=1 // pred_fallthru
      _
    // Predicated region
    $region22: #{time_embedding.1} parent=1 // pred_check
      _
    $region23: #{time_embedding.1} parent=1 // pred_check_branch
      %563 = sbr.rel (0) target = $region25
    $region24: #{time_embedding.1} parent=1 // pred_region
      %564 = dma.done [#allocation5], 128
    $region25: #{time_embedding.1} parent=1 // pred_fallthru
      _
    %565 = vsyncpa [#allocation4], 1
    %566 = vsyncpa [#allocation5], 1

</llo_original>
